<compile_context>
chip_gen: v6e
topology: v6e:2x2x1
jax: 0.10.0
libtpu: 0.0.40
codegen_flags: <defaults>
</compile_context>

<pallas_src>
import functools

import jax
import jax.numpy as jnp
from jax.experimental import pallas as pl
from jax.experimental.pallas import tpu as pltpu

_LANE = 128          # lane (last-dim) granularity
_BF16_SUBLANE = 16   # bf16 packs 2 rows per f32 sublane -> 16-aligned batch tiles


def _round_up(n, m):
    return ((n + m - 1) // m) * m


def _is_v7x():
    try:
        kind = jax.devices()[0].device_kind.lower()
    except Exception:
        return False
    return ("v7" in kind) or ("7x" in kind)


# ----------------------------------------------------------------------------
# Activations
# ----------------------------------------------------------------------------
def _elu(x):
    # ELU, alpha=1 (PyTorch default).  exp argument clamped so the inactive
    # branch of the select never produces inf.  (exp uses the EUP slot.)
    return jnp.where(x > 0, x, jnp.exp(jnp.minimum(x, 0.0)) - 1.0)


def _sigmoid_exact(x):
    # Exact sigmoid on the f32 accumulator: this is the module's final output,
    # so we do not use the approximate EUP reciprocal here.
    return 1.0 / (1.0 + jnp.exp(-x))


def _apply_act_kernel(h, act):
    if act == "elu":
        return _elu(h)
    if act == "sigmoid":
        return _sigmoid_exact(h)
    return h  # 'none'


def _apply_act_ref(h, act):
    if act == "elu":
        return _elu(h)
    if act == "sigmoid":
        return jax.nn.sigmoid(h)
    return h


# ----------------------------------------------------------------------------
# Kernel factory
# ----------------------------------------------------------------------------
def _make_autoencoder_kernel(enc_acts, dec_acts, compute_dtype=jnp.bfloat16):
    """enc_acts / dec_acts: tuples of 'elu' | 'sigmoid' | 'none', one per layer."""
    n_enc = len(enc_acts)
    all_acts = tuple(enc_acts) + tuple(dec_acts)
    n_layers = len(all_acts)

    def kernel(*refs):
        # refs = [x, w0, b0, ..., w{L-1}, b{L-1}, dec_out, latent]
        x_ref = refs[0]
        dec_out_ref = refs[1 + 2 * n_layers]
        latent_ref = refs[2 + 2 * n_layers]

        # Cast to bf16 in-kernel (no padded/cast HBM copy of x in the wrapper).
        h = x_ref[...].astype(compute_dtype)
        h32 = None
        idx = 1
        for li, act in enumerate(all_acts):
            w_ref = refs[idx]
            b_ref = refs[idx + 1]
            idx += 2
            k = h.shape[1]
            # The first layer's weight is lane-padded to a multiple of 128;
            # if dim_input itself is not, use only its first k rows (the
            # padded rows are zero anyway).  Static slice of a VMEM ref.
            w = w_ref[:k, :] if w_ref.shape[0] != k else w_ref[...]
            h32 = jnp.dot(h, w, preferred_element_type=jnp.float32) + b_ref[...]
            h32 = _apply_act_kernel(h32, act)
            if li == n_enc - 1:
                # Store the latent as soon as it is ready: frees its live
                # range and overlaps the store with the decoder matmuls.
                latent_ref[...] = h32.astype(latent_ref.dtype)
            if li < n_layers - 1:
                h = h32.astype(compute_dtype)

        dec_out_ref[...] = h32.astype(dec_out_ref.dtype)

    return kernel


# ----------------------------------------------------------------------------
# Parameter construction (deterministic, PyTorch-Linear-style init)
# ----------------------------------------------------------------------------
def _init_linear(key, fan_in, fan_out):
    """torch.nn.Linear default init: U(-1/sqrt(fan_in), 1/sqrt(fan_in)).
    Weight stored transposed as (fan_in, fan_out) so the kernel does x @ W."""
    kw, kb = jax.random.split(key)
    bound = 1.0 / jnp.sqrt(fan_in)
    w = jax.random.uniform(kw, (fan_in, fan_out), jnp.float32, -bound, bound)
    b = jax.random.uniform(kb, (fan_out,), jnp.float32, -bound, bound)
    return w, b


def build_dense_autoencoder_params(key, dim_input, dim_dense_enc, dim_dense_dec,
                                   dim_latent):
    """Returns (params, enc_acts, dec_acts); params is a list of (w, b) in f32."""
    enc_layers = []   # (fan_in, fan_out, activation)
    # DenseEncoder.input : Linear(dim_input, dim_dense_enc[0]) + ELU
    enc_layers.append((dim_input, dim_dense_enc[0], "elu"))
    # DenseEncoder.encoding
    for l in range(len(dim_dense_enc) - 1):
        act = "elu" if l != len(dim_dense_enc) - 2 else "none"
        enc_layers.append((dim_dense_enc[l], dim_dense_enc[l + 1], act))
    # DenseEncoder.abstraction
    enc_layers.append((dim_dense_enc[-1], dim_latent, "none"))

    dec_layers = []
    # DenseDecoder.unabstraction : Linear(dim_latent, dim_dense_dec[0]) + ELU
    dec_layers.append((dim_latent, dim_dense_dec[0], "elu"))
    # DenseDecoder.decoding
    dim_hidden = list(dim_dense_dec) + [dim_input]
    for l in range(len(dim_hidden) - 1):
        act = "elu" if l != len(dim_hidden) - 2 else "sigmoid"
        dec_layers.append((dim_hidden[l], dim_hidden[l + 1], act))

    all_layers = enc_layers + dec_layers
    keys = jax.random.split(key, len(all_layers))
    params = [_init_linear(k, fi, fo) for k, (fi, fo, _) in zip(keys, all_layers)]

    enc_acts = tuple(a for _, _, a in enc_layers)
    dec_acts = tuple(a for _, _, a in dec_layers)
    return params, enc_acts, dec_acts


def prepare_params(params, compute_dtype=jnp.bfloat16):
    """Zero-pad every (fan_in, fan_out) to multiples of 128 so all matmuls and
    output stores are lane-dense; cast weights to bf16 (biases stay f32).
    Padded rows/cols are zero, so they contribute nothing downstream.
    NOTE: we deliberately do NOT pad to 256 to 'fill' the v6e MXU — padding
    K/N adds no useful FLOPs; more batch rows per weight push is the lever."""
    prepared = []
    for w, b in params:
        fi, fo = w.shape
        fip, fop = _round_up(fi, _LANE), _round_up(fo, _LANE)
        w_p = jnp.zeros((fip, fop), jnp.float32).at[:fi, :fo].set(w)
        b_p = jnp.zeros((1, fop), jnp.float32).at[0, :fo].set(b)
        prepared.append((w_p.astype(compute_dtype), b_p))
    return prepared


# ----------------------------------------------------------------------------
# BlockSpec helpers
# ----------------------------------------------------------------------------
def _param_block_spec(shape):
    # Constant block index -> parameter stays VMEM-resident across the whole
    # batch grid (no per-step re-DMA).  Buffered(1): a block that never changes
    # index needs no double buffer, halving resident-parameter VMEM.
    try:
        return pl.BlockSpec(shape, lambda i: (0, 0),
                            pipeline_mode=pl.Buffered(1))
    except (TypeError, AttributeError):
        return pl.BlockSpec(shape, lambda i: (0, 0))


# ----------------------------------------------------------------------------
# Wrapper around pallas_call
# ----------------------------------------------------------------------------
@functools.partial(
    jax.jit,
    static_argnames=("enc_acts", "dec_acts", "dim_latent", "dim_output",
                     "block_batch", "out_dtype"))
def dense_autoencoder_forward(x, params_flat, enc_acts, dec_acts,
                              dim_latent, dim_output, block_batch=None,
                              out_dtype=jnp.float32):
    """x: (batch, dim_input); params_flat: padded bf16/f32 params.
    Returns (dec_out, latent) exactly like DenseAutoencoder.forward."""
    batch, dim_input = x.shape
    n_layers = len(enc_acts) + len(dec_acts)
    assert len(params_flat) == 2 * n_layers

    weights = params_flat[0::2]
    dim_latent_p = weights[len(enc_acts) - 1].shape[1]
    dim_out_p = weights[-1].shape[1]
    max_dim_p = max([w.shape[0] for w in weights] + [dim_out_p])

    is_v7x = _is_v7x()
    x_itemsize = x.dtype.itemsize
    out_itemsize = jnp.dtype(out_dtype).itemsize
    param_bytes = sum(int(p.size) * p.dtype.itemsize for p in params_flat)

    # ---------------- batch-tile / VMEM budgeting ----------------
    # v7x has only 64 MiB VMEM per TensorCore; v5e/v6e have 128 MiB.
    vmem_cap = (56 << 20) if is_v7x else (100 << 20)
    tile_budget = vmem_cap - param_bytes - (4 << 20)

    def tile_bytes(tb):
        return (2 * tb * dim_input * x_itemsize                      # x tile (double-buffered)
                + 2 * tb * (dim_out_p + dim_latent_p) * out_itemsize  # out tiles
                + tb * max_dim_p * 12)                                # live bf16 h + f32 h32 + slack

    if block_batch is None:
        cap = 512  # bigger tiles amortize per-step overhead & MXU weight pushes
        n_tiles = max(1, pl.cdiv(batch, cap))
        # Choose the tile so the last one is nearly full (minimize batch padding),
        # 16-aligned for dense bf16 sublane packing.
        block_batch = _round_up(pl.cdiv(batch, n_tiles), _BF16_SUBLANE)
    else:
        block_batch = _round_up(max(block_batch, _BF16_SUBLANE), _BF16_SUBLANE)
    while block_batch > _BF16_SUBLANE and tile_bytes(block_batch) > tile_budget:
        block_batch = max(_BF16_SUBLANE, _round_up(block_batch // 2, _BF16_SUBLANE))

    # v7x has 2 TensorCores: the "parallel" grid axis needs >= 2 steps to use both.
    if (is_v7x and _round_up(batch, block_batch) // block_batch < 2
            and block_batch >= 2 * _BF16_SUBLANE):
        block_batch = _round_up(pl.cdiv(block_batch, 2), _BF16_SUBLANE)

    padded_batch = _round_up(batch, block_batch)
    grid = (padded_batch // block_batch,)

    # ---------------- input handling (no padded HBM copy of x) ----------------
    # Only pad the batch dim when needed; the f32->bf16 cast and the handling
    # of a non-128-multiple dim_input happen inside the kernel.
    if padded_batch != batch:
        x_in = jnp.pad(x, ((0, padded_batch - batch), (0, 0)))
    else:
        x_in = x

    in_specs = [pl.BlockSpec((block_batch, dim_input), lambda i: (i, 0))]
    in_specs += [_param_block_spec(p.shape) for p in params_flat]
    # TODO(synk): for very large layer stacks (padded bf16 weights beyond the
    # v7x VMEM budget) switch params to memory_space=pl.ANY and double-buffer
    # layer i+1's (w, b) with pltpu.make_async_copy while the MXU runs layer i,
    # instead of keeping everything VMEM-resident.

    out_specs = (
        pl.BlockSpec((block_batch, dim_out_p), lambda i: (i, 0)),
        pl.BlockSpec((block_batch, dim_latent_p), lambda i: (i, 0)),
    )
    out_shape = (
        jax.ShapeDtypeStruct((padded_batch, dim_out_p), out_dtype),
        jax.ShapeDtypeStruct((padded_batch, dim_latent_p), out_dtype),
    )

    all_acts = tuple(enc_acts) + tuple(dec_acts)
    flops = 2 * padded_batch * sum(int(w.shape[0]) * int(w.shape[1])
                                   for w in weights)
    transcendentals = padded_batch * sum(
        int(w.shape[1]) for w, a in zip(weights, all_acts)
        if a in ("elu", "sigmoid"))
    bytes_accessed = (int(x_in.size) * x_itemsize
                      + param_bytes
                      + padded_batch * (dim_out_p + dim_latent_p) * out_itemsize)

    vmem_limit = param_bytes + tile_bytes(block_batch) + (4 << 20)
    vmem_limit = int(min(max(vmem_limit, 32 << 20), vmem_cap))

    kernel = _make_autoencoder_kernel(enc_acts, dec_acts)

    dec_p, lat_p = pl.pallas_call(
        kernel,
        grid=grid,
        in_specs=in_specs,
        out_specs=out_specs,
        out_shape=out_shape,
        compiler_params=pltpu.CompilerParams(
            dimension_semantics=("parallel",),
            vmem_limit_bytes=vmem_limit),
        cost_estimate=pl.CostEstimate(
            flops=flops,
            transcendentals=transcendentals,
            bytes_accessed=bytes_accessed),
    )(x_in, *params_flat)

    # Slice away batch padding and lane padding.
    return dec_p[:batch, :dim_output], lat_p[:batch, :dim_latent]


# ----------------------------------------------------------------------------
# Pure-JAX references
# ----------------------------------------------------------------------------
def _reference_forward_padded(x, params_flat, enc_acts, dec_acts):
    """Mirror of the kernel numerics: padded bf16 weights, f32 accumulation,
    in-kernel bf16 cast of x, first weight statically sliced to dim_input."""
    compute_dtype = params_flat[0].dtype
    h = x.astype(compute_dtype)
    acts = list(enc_acts) + list(dec_acts)
    n_enc = len(enc_acts)
    latent = None
    h32 = None
    for li, act in enumerate(acts):
        w, b = params_flat[2 * li], params_flat[2 * li + 1]
        w = w[:h.shape[1], :]
        h32 = jnp.dot(h, w, preferred_element_type=jnp.float32) + b
        h32 = _apply_act_ref(h32, act)
        if li == n_enc - 1:
            latent = h32
        h = h32.astype(compute_dtype)
    return h32, latent


def _reference_forward_f32(x, params, enc_acts, dec_acts):
    """Original full-f32 forward (matches the PyTorch module numerics)."""
    acts = list(enc_acts) + list(dec_acts)
    h = x
    latent = None
    for li, ((w, b), act) in enumerate(zip(params, acts)):
        h = h @ w + b
        h = _apply_act_ref(h, act)
        if li == len(enc_acts) - 1:
            latent = h
    return h, latent


# ----------------------------------------------------------------------------
# Main
# ----------------------------------------------------------------------------
if __name__ == "__main__":
    # Small, forward-consistent shapes.
    batch = 4
    dim_input = 64          # flattened input feature size
    dim_dense_enc = [32, 16]
    dim_dense_dec = [16, 32]
    dim_latent = 8

    key = jax.random.PRNGKey(0)
    k_params, k_x = jax.random.split(key)

    params, enc_acts, dec_acts = build_dense_autoencoder_params(
        k_params, dim_input, dim_dense_enc, dim_dense_dec, dim_latent)
    padded_params = prepare_params(params)
    params_flat = tuple(p for wb in padded_params for p in wb)

    x = jax.random.normal(k_x, (batch, dim_input), dtype=jnp.float32)

    dec_out, latent = dense_autoencoder_forward(
        x, params_flat, enc_acts=enc_acts, dec_acts=dec_acts,
        dim_latent=dim_latent, dim_output=dim_input)
    dec_out = jax.block_until_ready(dec_out)
    latent = jax.block_until_ready(latent)

    assert dec_out.shape == (batch, dim_input)
    assert latent.shape == (batch, dim_latent)

    # Check against a pure-JAX mirror of the kernel numerics.
    ref_dec_p, ref_lat_p = _reference_forward_padded(x, params_flat,
                                                     enc_acts, dec_acts)
    assert jnp.allclose(dec_out, ref_dec_p[:, :dim_input], atol=5e-3, rtol=5e-3)
    assert jnp.allclose(latent, ref_lat_p[:, :dim_latent], atol=5e-3, rtol=5e-3)

    # Loose sanity check against the original full-f32 forward (bf16 weights
    # introduce ~0.4% relative error).
    f32_dec, f32_lat = _reference_forward_f32(x, params, enc_acts, dec_acts)
    assert jnp.allclose(dec_out, f32_dec, atol=5e-2, rtol=5e-2)
    assert jnp.allclose(latent, f32_lat, atol=5e-2, rtol=5e-2)

    # TODO(synk): Selection / forward_sel (stochastic latent sampling) is not
    # part of DenseAutoencoder.forward and is intentionally not implemented.
    print("KERNEL_OK")
</pallas_src>

<mosaic_0001>
module attributes {stable_mosaic.version = 11 : i64} {
  func.func @kernel(%arg0: i32, %arg1: memref<16x64xf32, #tpu.memory_space<vmem>>, %arg2: memref<128x128xbf16, #tpu.memory_space<vmem>>, %arg3: memref<1x128xf32, #tpu.memory_space<vmem>>, %arg4: memref<128x128xbf16, #tpu.memory_space<vmem>>, %arg5: memref<1x128xf32, #tpu.memory_space<vmem>>, %arg6: memref<128x128xbf16, #tpu.memory_space<vmem>>, %arg7: memref<1x128xf32, #tpu.memory_space<vmem>>, %arg8: memref<128x128xbf16, #tpu.memory_space<vmem>>, %arg9: memref<1x128xf32, #tpu.memory_space<vmem>>, %arg10: memref<128x128xbf16, #tpu.memory_space<vmem>>, %arg11: memref<1x128xf32, #tpu.memory_space<vmem>>, %arg12: memref<128x128xbf16, #tpu.memory_space<vmem>>, %arg13: memref<1x128xf32, #tpu.memory_space<vmem>>, %arg14: memref<16x128xf32, #tpu.memory_space<vmem>>, %arg15: memref<16x128xf32, #tpu.memory_space<vmem>>) attributes {dimension_semantics = [#tpu.dimension_semantics<parallel>], iteration_bounds = array<i64: 1>, scalar_prefetch = 0 : i64, scratch_operands = 0 : i64, tpu.core_type = #tpu.core_type<tc>, window_params = [{transform_indices = @transform_0, window_bounds = array<i64: 16, 64>}, {pipeline_mode = #tpu.pipeline_mode<synchronous>, transform_indices = @transform_1, window_bounds = array<i64: 128, 128>}, {pipeline_mode = #tpu.pipeline_mode<synchronous>, transform_indices = @transform_2, window_bounds = array<i64: 1, 128>}, {pipeline_mode = #tpu.pipeline_mode<synchronous>, transform_indices = @transform_3, window_bounds = array<i64: 128, 128>}, {pipeline_mode = #tpu.pipeline_mode<synchronous>, transform_indices = @transform_4, window_bounds = array<i64: 1, 128>}, {pipeline_mode = #tpu.pipeline_mode<synchronous>, transform_indices = @transform_5, window_bounds = array<i64: 128, 128>}, {pipeline_mode = #tpu.pipeline_mode<synchronous>, transform_indices = @transform_6, window_bounds = array<i64: 1, 128>}, {pipeline_mode = #tpu.pipeline_mode<synchronous>, transform_indices = @transform_7, window_bounds = array<i64: 128, 128>}, {pipeline_mode = #tpu.pipeline_mode<synchronous>, transform_indices = @transform_8, window_bounds = array<i64: 1, 128>}, {pipeline_mode = #tpu.pipeline_mode<synchronous>, transform_indices = @transform_9, window_bounds = array<i64: 128, 128>}, {pipeline_mode = #tpu.pipeline_mode<synchronous>, transform_indices = @transform_10, window_bounds = array<i64: 1, 128>}, {pipeline_mode = #tpu.pipeline_mode<synchronous>, transform_indices = @transform_11, window_bounds = array<i64: 128, 128>}, {pipeline_mode = #tpu.pipeline_mode<synchronous>, transform_indices = @transform_12, window_bounds = array<i64: 1, 128>}, {transform_indices = @transform_13, window_bounds = array<i64: 16, 128>}, {transform_indices = @transform_14, window_bounds = array<i64: 16, 128>}]} {
    %c0 = arith.constant 0 : index
    %c0_0 = arith.constant 0 : index
    %0 = vector.load %arg1[%c0, %c0_0] : memref<16x64xf32, #tpu.memory_space<vmem>>, vector<16x64xf32>
    %1 = arith.truncf %0 : vector<16x64xf32> to vector<16x64xbf16>
    %c0_1 = arith.constant 0 : index
    %c0_2 = arith.constant 0 : index
    %2 = vector.load %arg2[%c0_1, %c0_2] : memref<128x128xbf16, #tpu.memory_space<vmem>>, vector<64x128xbf16>
    %cst = arith.constant dense<0.000000e+00> : vector<16x128xf32>
    %3 = tpu.matmul %1, %2, %cst {dimension_numbers = #tpu.dot_dimension_numbers<[1], [0], [0], [1], [0, 0, 1, 1], [], []>} : vector<16x64xbf16>, vector<64x128xbf16>, vector<16x128xf32> -> vector<16x128xf32>
    %c0_3 = arith.constant 0 : index
    %c0_4 = arith.constant 0 : index
    %4 = vector.load %arg3[%c0_3, %c0_4] : memref<1x128xf32, #tpu.memory_space<vmem>>, vector<1x128xf32>
    %5 = vector.broadcast %4 : vector<1x128xf32> to vector<16x128xf32>
    %6 = arith.addf %3, %5 : vector<16x128xf32>
    %cst_5 = arith.constant 0.000000e+00 : f32
    %7 = vector.broadcast %cst_5 : f32 to vector<16x128xf32>
    %8 = arith.cmpf ogt, %6, %7 : vector<16x128xf32>
    %cst_6 = arith.constant 0.000000e+00 : f32
    %9 = vector.broadcast %cst_6 : f32 to vector<16x128xf32>
    %10 = arith.minimumf %6, %9 : vector<16x128xf32>
    %11 = math.exp %10 : vector<16x128xf32>
    %cst_7 = arith.constant 1.000000e+00 : f32
    %12 = vector.broadcast %cst_7 : f32 to vector<16x128xf32>
    %13 = arith.subf %11, %12 : vector<16x128xf32>
    %14 = arith.select %8, %6, %13 : vector<16x128xi1>, vector<16x128xf32>
    %15 = arith.truncf %14 : vector<16x128xf32> to vector<16x128xbf16>
    %c0_8 = arith.constant 0 : index
    %c0_9 = arith.constant 0 : index
    %16 = vector.load %arg4[%c0_8, %c0_9] : memref<128x128xbf16, #tpu.memory_space<vmem>>, vector<128x128xbf16>
    %cst_10 = arith.constant dense<0.000000e+00> : vector<16x128xf32>
    %17 = tpu.matmul %15, %16, %cst_10 {dimension_numbers = #tpu.dot_dimension_numbers<[1], [0], [0], [1], [0, 0, 1, 1], [], []>} : vector<16x128xbf16>, vector<128x128xbf16>, vector<16x128xf32> -> vector<16x128xf32>
    %c0_11 = arith.constant 0 : index
    %c0_12 = arith.constant 0 : index
    %18 = vector.load %arg5[%c0_11, %c0_12] : memref<1x128xf32, #tpu.memory_space<vmem>>, vector<1x128xf32>
    %19 = vector.broadcast %18 : vector<1x128xf32> to vector<16x128xf32>
    %20 = arith.addf %17, %19 : vector<16x128xf32>
    %21 = arith.truncf %20 : vector<16x128xf32> to vector<16x128xbf16>
    %c0_13 = arith.constant 0 : index
    %c0_14 = arith.constant 0 : index
    %22 = vector.load %arg6[%c0_13, %c0_14] : memref<128x128xbf16, #tpu.memory_space<vmem>>, vector<128x128xbf16>
    %cst_15 = arith.constant dense<0.000000e+00> : vector<16x128xf32>
    %23 = tpu.matmul %21, %22, %cst_15 {dimension_numbers = #tpu.dot_dimension_numbers<[1], [0], [0], [1], [0, 0, 1, 1], [], []>} : vector<16x128xbf16>, vector<128x128xbf16>, vector<16x128xf32> -> vector<16x128xf32>
    %c0_16 = arith.constant 0 : index
    %c0_17 = arith.constant 0 : index
    %24 = vector.load %arg7[%c0_16, %c0_17] : memref<1x128xf32, #tpu.memory_space<vmem>>, vector<1x128xf32>
    %25 = vector.broadcast %24 : vector<1x128xf32> to vector<16x128xf32>
    %26 = arith.addf %23, %25 : vector<16x128xf32>
    %c0_18 = arith.constant 0 : index
    %c0_19 = arith.constant 0 : index
    %27 = vector.load %arg15[%c0_18, %c0_19] : memref<16x128xf32, #tpu.memory_space<vmem>>, vector<16x128xf32>
    tpu.vector_store %arg15[%c0_18, %c0_19], %26 {strides = array<i32>} : memref<16x128xf32, #tpu.memory_space<vmem>>, vector<16x128xf32>,
    %28 = arith.truncf %26 : vector<16x128xf32> to vector<16x128xbf16>
    %c0_20 = arith.constant 0 : index
    %c0_21 = arith.constant 0 : index
    %29 = vector.load %arg8[%c0_20, %c0_21] : memref<128x128xbf16, #tpu.memory_space<vmem>>, vector<128x128xbf16>
    %cst_22 = arith.constant dense<0.000000e+00> : vector<16x128xf32>
    %30 = tpu.matmul %28, %29, %cst_22 {dimension_numbers = #tpu.dot_dimension_numbers<[1], [0], [0], [1], [0, 0, 1, 1], [], []>} : vector<16x128xbf16>, vector<128x128xbf16>, vector<16x128xf32> -> vector<16x128xf32>
    %c0_23 = arith.constant 0 : index
    %c0_24 = arith.constant 0 : index
    %31 = vector.load %arg9[%c0_23, %c0_24] : memref<1x128xf32, #tpu.memory_space<vmem>>, vector<1x128xf32>
    %32 = vector.broadcast %31 : vector<1x128xf32> to vector<16x128xf32>
    %33 = arith.addf %30, %32 : vector<16x128xf32>
    %cst_25 = arith.constant 0.000000e+00 : f32
    %34 = vector.broadcast %cst_25 : f32 to vector<16x128xf32>
    %35 = arith.cmpf ogt, %33, %34 : vector<16x128xf32>
    %cst_26 = arith.constant 0.000000e+00 : f32
    %36 = vector.broadcast %cst_26 : f32 to vector<16x128xf32>
    %37 = arith.minimumf %33, %36 : vector<16x128xf32>
    %38 = math.exp %37 : vector<16x128xf32>
    %cst_27 = arith.constant 1.000000e+00 : f32
    %39 = vector.broadcast %cst_27 : f32 to vector<16x128xf32>
    %40 = arith.subf %38, %39 : vector<16x128xf32>
    %41 = arith.select %35, %33, %40 : vector<16x128xi1>, vector<16x128xf32>
    %42 = arith.truncf %41 : vector<16x128xf32> to vector<16x128xbf16>
    %c0_28 = arith.constant 0 : index
    %c0_29 = arith.constant 0 : index
    %43 = vector.load %arg10[%c0_28, %c0_29] : memref<128x128xbf16, #tpu.memory_space<vmem>>, vector<128x128xbf16>
    %cst_30 = arith.constant dense<0.000000e+00> : vector<16x128xf32>
    %44 = tpu.matmul %42, %43, %cst_30 {dimension_numbers = #tpu.dot_dimension_numbers<[1], [0], [0], [1], [0, 0, 1, 1], [], []>} : vector<16x128xbf16>, vector<128x128xbf16>, vector<16x128xf32> -> vector<16x128xf32>
    %c0_31 = arith.constant 0 : index
    %c0_32 = arith.constant 0 : index
    %45 = vector.load %arg11[%c0_31, %c0_32] : memref<1x128xf32, #tpu.memory_space<vmem>>, vector<1x128xf32>
    %46 = vector.broadcast %45 : vector<1x128xf32> to vector<16x128xf32>
    %47 = arith.addf %44, %46 : vector<16x128xf32>
    %cst_33 = arith.constant 0.000000e+00 : f32
    %48 = vector.broadcast %cst_33 : f32 to vector<16x128xf32>
    %49 = arith.cmpf ogt, %47, %48 : vector<16x128xf32>
    %cst_34 = arith.constant 0.000000e+00 : f32
    %50 = vector.broadcast %cst_34 : f32 to vector<16x128xf32>
    %51 = arith.minimumf %47, %50 : vector<16x128xf32>
    %52 = math.exp %51 : vector<16x128xf32>
    %cst_35 = arith.constant 1.000000e+00 : f32
    %53 = vector.broadcast %cst_35 : f32 to vector<16x128xf32>
    %54 = arith.subf %52, %53 : vector<16x128xf32>
    %55 = arith.select %49, %47, %54 : vector<16x128xi1>, vector<16x128xf32>
    %56 = arith.truncf %55 : vector<16x128xf32> to vector<16x128xbf16>
    %c0_36 = arith.constant 0 : index
    %c0_37 = arith.constant 0 : index
    %57 = vector.load %arg12[%c0_36, %c0_37] : memref<128x128xbf16, #tpu.memory_space<vmem>>, vector<128x128xbf16>
    %cst_38 = arith.constant dense<0.000000e+00> : vector<16x128xf32>
    %58 = tpu.matmul %56, %57, %cst_38 {dimension_numbers = #tpu.dot_dimension_numbers<[1], [0], [0], [1], [0, 0, 1, 1], [], []>} : vector<16x128xbf16>, vector<128x128xbf16>, vector<16x128xf32> -> vector<16x128xf32>
    %c0_39 = arith.constant 0 : index
    %c0_40 = arith.constant 0 : index
    %59 = vector.load %arg13[%c0_39, %c0_40] : memref<1x128xf32, #tpu.memory_space<vmem>>, vector<1x128xf32>
    %60 = vector.broadcast %59 : vector<1x128xf32> to vector<16x128xf32>
    %61 = arith.addf %58, %60 : vector<16x128xf32>
    %cst_41 = arith.constant 0.000000e+00 : f32
    %62 = vector.broadcast %cst_41 : f32 to vector<16x128xf32>
    %63 = arith.subf %62, %61 : vector<16x128xf32>
    %64 = math.exp %63 : vector<16x128xf32>
    %cst_42 = arith.constant 1.000000e+00 : f32
    %65 = vector.broadcast %cst_42 : f32 to vector<16x128xf32>
    %66 = arith.addf %65, %64 : vector<16x128xf32>
    %cst_43 = arith.constant 1.000000e+00 : f32
    %67 = vector.broadcast %cst_43 : f32 to vector<16x128xf32>
    %68 = arith.divf %67, %66 : vector<16x128xf32>
    %c0_44 = arith.constant 0 : index
    %c0_45 = arith.constant 0 : index
    %69 = vector.load %arg14[%c0_44, %c0_45] : memref<16x128xf32, #tpu.memory_space<vmem>>, vector<16x128xf32>
    tpu.vector_store %arg14[%c0_44, %c0_45], %68 {strides = array<i32>} : memref<16x128xf32, #tpu.memory_space<vmem>>, vector<16x128xf32>,
    return
  }
  func.func @transform_0(%arg0: i32) -> (i32, i32) {
    %c0_i32 = arith.constant 0 : i32
    %c0_i32_0 = arith.constant 0 : i32
    return %arg0, %c0_i32 : i32, i32
  }
  func.func @transform_1(%arg0: i32) -> (i32, i32) {
    %c0_i32 = arith.constant 0 : i32
    %c0_i32_0 = arith.constant 0 : i32
    %c0_i32_1 = arith.constant 0 : i32
    return %c0_i32, %c0_i32_0 : i32, i32
  }
  func.func @transform_2(%arg0: i32) -> (i32, i32) {
    %c0_i32 = arith.constant 0 : i32
    %c0_i32_0 = arith.constant 0 : i32
    %c0_i32_1 = arith.constant 0 : i32
    return %c0_i32, %c0_i32_0 : i32, i32
  }
  func.func @transform_3(%arg0: i32) -> (i32, i32) {
    %c0_i32 = arith.constant 0 : i32
    %c0_i32_0 = arith.constant 0 : i32
    %c0_i32_1 = arith.constant 0 : i32
    return %c0_i32, %c0_i32_0 : i32, i32
  }
  func.func @transform_4(%arg0: i32) -> (i32, i32) {
    %c0_i32 = arith.constant 0 : i32
    %c0_i32_0 = arith.constant 0 : i32
    %c0_i32_1 = arith.constant 0 : i32
    return %c0_i32, %c0_i32_0 : i32, i32
  }
  func.func @transform_5(%arg0: i32) -> (i32, i32) {
    %c0_i32 = arith.constant 0 : i32
    %c0_i32_0 = arith.constant 0 : i32
    %c0_i32_1 = arith.constant 0 : i32
    return %c0_i32, %c0_i32_0 : i32, i32
  }
  func.func @transform_6(%arg0: i32) -> (i32, i32) {
    %c0_i32 = arith.constant 0 : i32
    %c0_i32_0 = arith.constant 0 : i32
    %c0_i32_1 = arith.constant 0 : i32
    return %c0_i32, %c0_i32_0 : i32, i32
  }
  func.func @transform_7(%arg0: i32) -> (i32, i32) {
    %c0_i32 = arith.constant 0 : i32
    %c0_i32_0 = arith.constant 0 : i32
    %c0_i32_1 = arith.constant 0 : i32
    return %c0_i32, %c0_i32_0 : i32, i32
  }
  func.func @transform_8(%arg0: i32) -> (i32, i32) {
    %c0_i32 = arith.constant 0 : i32
    %c0_i32_0 = arith.constant 0 : i32
    %c0_i32_1 = arith.constant 0 : i32
    return %c0_i32, %c0_i32_0 : i32, i32
  }
  func.func @transform_9(%arg0: i32) -> (i32, i32) {
    %c0_i32 = arith.constant 0 : i32
    %c0_i32_0 = arith.constant 0 : i32
    %c0_i32_1 = arith.constant 0 : i32
    return %c0_i32, %c0_i32_0 : i32, i32
  }
  func.func @transform_10(%arg0: i32) -> (i32, i32) {
    %c0_i32 = arith.constant 0 : i32
    %c0_i32_0 = arith.constant 0 : i32
    %c0_i32_1 = arith.constant 0 : i32
    return %c0_i32, %c0_i32_0 : i32, i32
  }
  func.func @transform_11(%arg0: i32) -> (i32, i32) {
    %c0_i32 = arith.constant 0 : i32
    %c0_i32_0 = arith.constant 0 : i32
    %c0_i32_1 = arith.constant 0 : i32
    return %c0_i32, %c0_i32_0 : i32, i32
  }
  func.func @transform_12(%arg0: i32) -> (i32, i32) {
    %c0_i32 = arith.constant 0 : i32
    %c0_i32_0 = arith.constant 0 : i32
    %c0_i32_1 = arith.constant 0 : i32
    return %c0_i32, %c0_i32_0 : i32, i32
  }
  func.func @transform_13(%arg0: i32) -> (i32, i32) {
    %c0_i32 = arith.constant 0 : i32
    %c0_i32_0 = arith.constant 0 : i32
    return %arg0, %c0_i32 : i32, i32
  }
  func.func @transform_14(%arg0: i32) -> (i32, i32) {
    %c0_i32 = arith.constant 0 : i32
    %c0_i32_0 = arith.constant 0 : i32
    return %arg0, %c0_i32 : i32, i32
  }
}

</mosaic_0001>

<llo_original>
// kernel: dense_autoencoder_forward.1
$region0: #{dense_autoencoder_forward.1}
  #allocation0 [shape = 'u32[]', space=smem, size = 0x4, offset = 0x4, fixed_abs, tag = 'smem constant byte address 0x4 - core index']
  #allocation1 [shape = 'u32[144,128]{1,0:T(1,128)}', space=vmem, size = 0x12000, scoped, tag = 'internal scratch']
  %s0 = inlined_call_operand.vmem [shape: f32[16,64], index: 0, kind: input, shape index: {}]
  %s1 = inlined_call_operand.hbm [shape: bf16[128,128], index: 1, kind: input, shape index: {}]
  %s2 = inlined_call_operand.vmem [shape: f32[1,128], index: 2, kind: input, shape index: {}]
  %s3 = inlined_call_operand.hbm [shape: bf16[128,128], index: 3, kind: input, shape index: {}]
  %s4 = inlined_call_operand.vmem [shape: f32[1,128], index: 4, kind: input, shape index: {}]
  %s5 = inlined_call_operand.hbm [shape: bf16[128,128], index: 5, kind: input, shape index: {}]
  %s6 = inlined_call_operand.vmem [shape: f32[1,128], index: 6, kind: input, shape index: {}]
  %s7 = inlined_call_operand.hbm [shape: bf16[128,128], index: 7, kind: input, shape index: {}]
  %s8 = inlined_call_operand.vmem [shape: f32[1,128], index: 8, kind: input, shape index: {}]
  %s9 = inlined_call_operand.hbm [shape: bf16[128,128], index: 9, kind: input, shape index: {}]
  %s10 = inlined_call_operand.vmem [shape: f32[1,128], index: 10, kind: input, shape index: {}]
  %s11 = inlined_call_operand.hbm [shape: bf16[128,128], index: 11, kind: input, shape index: {}]
  %s12 = inlined_call_operand.vmem [shape: f32[1,128], index: 12, kind: input, shape index: {}]
  %s13 = inlined_call_operand.vmem [shape: f32[16,128], index: 13, kind: output, shape index: {0}]
  %s14 = inlined_call_operand.vmem [shape: f32[16,128], index: 14, kind: output, shape index: {1}]
  %15 = xla_tuple %s13, %s14
  %s16 = sld [smem:[#allocation0]]
  $region94: #{dense_autoencoder_forward.1} parent=0
    _
  %s18 = ssub.s32 1, %s16
  %s19 = scalar_select 0, %s18, %s16
  $region1: #{dense_autoencoder_forward.1} parent=0
    #allocation2 [shape = 'u8[32768]{0}', space=vmem, size = 0x8000, scoped, tag = 'input window, operand 1, single buffered']
    #allocation3 [shape = 's32[1]{0}', space=sflag, size = 0x4, scoped, tag = 'scoped memory for dense_autoencoder_forward.1']
    #allocation4 [shape = 'u8[32768]{0}', space=vmem, size = 0x8000, scoped, tag = 'input window, operand 3, single buffered']
    #allocation5 [shape = 's32[1]{0}', space=sflag, size = 0x4, scoped, tag = 'scoped memory for dense_autoencoder_forward.1']
    #allocation6 [shape = 'u8[32768]{0}', space=vmem, size = 0x8000, scoped, tag = 'input window, operand 5, single buffered']
    #allocation7 [shape = 'u8[32768]{0}', space=vmem, size = 0x8000, scoped, tag = 'input window, operand 7, single buffered']
    #allocation8 [shape = 's32[1]{0}', space=sflag, size = 0x4, scoped, tag = 'scoped memory for dense_autoencoder_forward.1']
    #allocation9 [shape = 'u8[32768]{0}', space=vmem, size = 0x8000, scoped, tag = 'input window, operand 9, single buffered']
    #allocation10 [shape = 'u8[32768]{0}', space=vmem, size = 0x8000, scoped, tag = 'input window, operand 11, single buffered']
    #allocation11 [shape = 's32[1]{0}', space=sflag, size = 0x4, scoped, tag = 'scoped memory for dense_autoencoder_forward.1']
    %20 = vsyncpa [#allocation3], 0
    %21 = vsyncpa [#allocation5], 0
    %22 = vsyncpa [#allocation8], 0
    %23 = vsyncpa [#allocation11], 0
    // Predicated region
    $region2: #{dense_autoencoder_forward.1} parent=1 // pred_check
      _
    $region3: #{dense_autoencoder_forward.1} parent=1 // pred_check_branch
      %25 = sbr.rel (0) target = $region5
    $region4: #{dense_autoencoder_forward.1} parent=1 // pred_region
      _
    $region5: #{dense_autoencoder_forward.1} parent=1 // pred_fallthru
      _
    // Predicated region
    $region6: #{dense_autoencoder_forward.1} parent=1 // pred_check
      _
    $region7: #{dense_autoencoder_forward.1} parent=1 // pred_check_branch
      %27 = sbr.rel (0) target = $region9
    $region8: #{dense_autoencoder_forward.1} parent=1 // pred_region
      %s29 = ssub.s32 1024, 1024
      %30 = vsyncadd [#allocation3], %s29
      %s31 = sshll.u32 [#allocation2], 4
      %s32 = int_to_ptr.vmem [resolvable:$true] %s31
      %37 = dma.hbm_to_vmem [thread:$0]  %s1, 1024, %s32, [#allocation3], 64, 64, 4
    $region9: #{dense_autoencoder_forward.1} parent=1 // pred_fallthru
      _
    // Predicated region
    $region10: #{dense_autoencoder_forward.1} parent=1 // pred_check
      _
    $region11: #{dense_autoencoder_forward.1} parent=1 // pred_check_branch
      %39 = sbr.rel (0) target = $region13
    $region12: #{dense_autoencoder_forward.1} parent=1 // pred_region
      _
    $region13: #{dense_autoencoder_forward.1} parent=1 // pred_fallthru
      _
    // Predicated region
    $region14: #{dense_autoencoder_forward.1} parent=1 // pred_check
      _
    $region15: #{dense_autoencoder_forward.1} parent=1 // pred_check_branch
      %41 = sbr.rel (0) target = $region17
    $region16: #{dense_autoencoder_forward.1} parent=1 // pred_region
      %s43 = ssub.s32 1024, 1024
      %44 = vsyncadd [#allocation5], %s43
      %s45 = sshll.u32 [#allocation4], 4
      %s46 = int_to_ptr.vmem [resolvable:$true] %s45
      %51 = dma.hbm_to_vmem [thread:$0]  %s3, 1024, %s46, [#allocation5], 64, 64, 4
    $region17: #{dense_autoencoder_forward.1} parent=1 // pred_fallthru
      _
    // Predicated region
    $region18: #{dense_autoencoder_forward.1} parent=1 // pred_check
      _
    $region19: #{dense_autoencoder_forward.1} parent=1 // pred_check_branch
      %53 = sbr.rel (0) target = $region21
    $region20: #{dense_autoencoder_forward.1} parent=1 // pred_region
      _
    $region21: #{dense_autoencoder_forward.1} parent=1 // pred_fallthru
      _
    // Predicated region
    $region22: #{dense_autoencoder_forward.1} parent=1 // pred_check
      _
    $region23: #{dense_autoencoder_forward.1} parent=1 // pred_check_branch
      %55 = sbr.rel (0) target = $region25
    $region24: #{dense_autoencoder_forward.1} parent=1 // pred_region
      %s57 = ssub.s32 1024, 1024
      %58 = vsyncadd [#allocation5], %s57
      %s59 = sshll.u32 [#allocation6], 4
      %s60 = int_to_ptr.vmem [resolvable:$true] %s59
      %65 = dma.hbm_to_vmem [thread:$0]  %s5, 1024, %s60, [#allocation5], 64, 64, 4
    $region25: #{dense_autoencoder_forward.1} parent=1 // pred_fallthru
      _
    // Predicated region
    $region26: #{dense_autoencoder_forward.1} parent=1 // pred_check
      _
    $region27: #{dense_autoencoder_forward.1} parent=1 // pred_check_branch
      %67 = sbr.rel (0) target = $region29
    $region28: #{dense_autoencoder_forward.1} parent=1 // pred_region
      _
    $region29: #{dense_autoencoder_forward.1} parent=1 // pred_fallthru
      _
    // Predicated region
    $region30: #{dense_autoencoder_forward.1} parent=1 // pred_check
      _
    $region31: #{dense_autoencoder_forward.1} parent=1 // pred_check_branch
      %69 = sbr.rel (0) target = $region33
    $region32: #{dense_autoencoder_forward.1} parent=1 // pred_region
      %s71 = ssub.s32 1024, 1024
      %72 = vsyncadd [#allocation8], %s71
      %s73 = sshll.u32 [#allocation7], 4
      %s74 = int_to_ptr.vmem [resolvable:$true] %s73
      %79 = dma.hbm_to_vmem [thread:$0]  %s7, 1024, %s74, [#allocation8], 64, 64, 4
    $region33: #{dense_autoencoder_forward.1} parent=1 // pred_fallthru
      _
    // Predicated region
    $region34: #{dense_autoencoder_forward.1} parent=1 // pred_check
      _
    $region35: #{dense_autoencoder_forward.1} parent=1 // pred_check_branch
      %81 = sbr.rel (0) target = $region37
    $region36: #{dense_autoencoder_forward.1} parent=1 // pred_region
      _
    $region37: #{dense_autoencoder_forward.1} parent=1 // pred_fallthru
      _
    // Predicated region
    $region38: #{dense_autoencoder_forward.1} parent=1 // pred_check
      _
    $region39: #{dense_autoencoder_forward.1} parent=1 // pred_check_branch
      %83 = sbr.rel (0) target = $region41
    $region40: #{dense_autoencoder_forward.1} parent=1 // pred_region
      %s85 = ssub.s32 1024, 1024
      %86 = vsyncadd [#allocation8], %s85
      %s87 = sshll.u32 [#allocation9], 4
      %s88 = int_to_ptr.vmem [resolvable:$true] %s87
      %93 = dma.hbm_to_vmem [thread:$0]  %s9, 1024, %s88, [#allocation8], 64, 64, 4
    $region41: #{dense_autoencoder_forward.1} parent=1 // pred_fallthru
      _
    // Predicated region
    $region42: #{dense_autoencoder_forward.1} parent=1 // pred_check
      _
    $region43: #{dense_autoencoder_forward.1} parent=1 // pred_check_branch
      %95 = sbr.rel (0) target = $region45
    $region44: #{dense_autoencoder_forward.1} parent=1 // pred_region
      _
    $region45: #{dense_autoencoder_forward.1} parent=1 // pred_fallthru
      _
    // Predicated region
    $region46: #{dense_autoencoder_forward.1} parent=1 // pred_check
      _
    $region47: #{dense_autoencoder_forward.1} parent=1 // pred_check_branch
      %97 = sbr.rel (0) target = $region49
    $region48: #{dense_autoencoder_forward.1} parent=1 // pred_region
      %s99 = ssub.s32 1024, 1024
      %100 = vsyncadd [#allocation11], %s99
      %s101 = sshll.u32 [#allocation10], 4
      %s102 = int_to_ptr.vmem [resolvable:$true] %s101
      %107 = dma.hbm_to_vmem [thread:$0]  %s11, 1024, %s102, [#allocation11], 64, 64, 4
    $region49: #{dense_autoencoder_forward.1} parent=1 // pred_fallthru
      _
    // Predicated region
    $region50: #{dense_autoencoder_forward.1} parent=1 // pred_check
      _
    $region51: #{dense_autoencoder_forward.1} parent=1 // pred_check_branch
      %109 = sbr.rel (0) target = $region53
    $region52: #{dense_autoencoder_forward.1} parent=1 // pred_region
      _
    $region53: #{dense_autoencoder_forward.1} parent=1 // pred_fallthru
      _
    // Predicated region
    $region54: #{dense_autoencoder_forward.1} parent=1 // pred_check
      _
    $region55: #{dense_autoencoder_forward.1} parent=1 // pred_check_branch
      %111 = sbr.rel (0) target = $region57
    $region56: #{dense_autoencoder_forward.1} parent=1 // pred_region
      %112 = dma.done [#allocation3], 1024
    $region57: #{dense_autoencoder_forward.1} parent=1 // pred_fallthru
      _
    // Predicated region
    $region58: #{dense_autoencoder_forward.1} parent=1 // pred_check
      _
    $region59: #{dense_autoencoder_forward.1} parent=1 // pred_check_branch
      %114 = sbr.rel (0) target = $region61
    $region60: #{dense_autoencoder_forward.1} parent=1 // pred_region
      %115 = dma.done [#allocation5], 1024
    $region61: #{dense_autoencoder_forward.1} parent=1 // pred_fallthru
      _
    // Predicated region
    $region62: #{dense_autoencoder_forward.1} parent=1 // pred_check
      _
    $region63: #{dense_autoencoder_forward.1} parent=1 // pred_check_branch
      %117 = sbr.rel (0) target = $region65
    $region64: #{dense_autoencoder_forward.1} parent=1 // pred_region
      %118 = dma.done [#allocation5], 1024
    $region65: #{dense_autoencoder_forward.1} parent=1 // pred_fallthru
      _
    // Predicated region
    $region66: #{dense_autoencoder_forward.1} parent=1 // pred_check
      _
    $region67: #{dense_autoencoder_forward.1} parent=1 // pred_check_branch
      %120 = sbr.rel (0) target = $region69
    $region68: #{dense_autoencoder_forward.1} parent=1 // pred_region
      %121 = dma.done [#allocation8], 1024
    $region69: #{dense_autoencoder_forward.1} parent=1 // pred_fallthru
      _
    // Predicated region
    $region70: #{dense_autoencoder_forward.1} parent=1 // pred_check
      _
    $region71: #{dense_autoencoder_forward.1} parent=1 // pred_check_branch
      %123 = sbr.rel (0) target = $region73
    $region72: #{dense_autoencoder_forward.1} parent=1 // pred_region
      %124 = dma.done [#allocation8], 1024
    $region73: #{dense_autoencoder_forward.1} parent=1 // pred_fallthru
      _
    // Predicated region
    $region74: #{dense_autoencoder_forward.1} parent=1 // pred_check
      _
    $region75: #{dense_autoencoder_forward.1} parent=1 // pred_check_branch
      %126 = sbr.rel (0) target = $region77
    $region76: #{dense_autoencoder_forward.1} parent=1 // pred_region
      %127 = dma.done [#allocation11], 1024
    $region77: #{dense_autoencoder_forward.1} parent=1 // pred_fallthru
      _
    %v129 = vld [vmem:[%s0] sm:$0xff]
    %v130 = vld [vmem:[%s0 + $0x8] sm:$0xff]
    %v131 = vpack.c.bf16 %v130, %v129
    %v132 = vld [vmem:[#allocation2] sm:$0xf]
    %v133 = vld [vmem:[#allocation2 + $0x4] sm:$0xf]
    %v134 = vld [vmem:[#allocation2 + $0x8] sm:$0xf]
    %v135 = vld [vmem:[#allocation2 + $0xc] sm:$0xf]
    %v136 = vld [vmem:[#allocation2 + $0x10] sm:$0xf]
    %v137 = vld [vmem:[#allocation2 + $0x14] sm:$0xf]
    %v138 = vld [vmem:[#allocation2 + $0x18] sm:$0xf]
    %v139 = vld [vmem:[#allocation2 + $0x1c] sm:$0xf]
    %v140 = vld [vmem:[%s2] sm:$0x1]
    %v142 = vlaneseq
    %v143 = vshrl.u32 %v142, 7
    %v144 = vsub.s32 0, %v143
    %v145 = vrot.slane %v140, %v144
    %v155 = vunpack.c.l.b16 %v132
    %v156 = vunpack.c.l.b16 %v133
    %v157 = vunpack.c.l.b16 %v134
    %v158 = vunpack.c.l.b16 %v135
    %v159 = vunpack.c.l.b16 %v136
    %v160 = vunpack.c.l.b16 %v137
    %v161 = vunpack.c.l.b16 %v138
    %v162 = vunpack.c.l.b16 %v139
    %v163 = vpack.c.b16 %v156, %v155
    %v164 = vpack.c.b16 %v158, %v157
    %v165 = vpack.c.b16 %v160, %v159
    %v166 = vpack.c.b16 %v162, %v161
    %vm171 = vcmask 523264
    %v173 = vsel %vm171, %v131, 0
    %175 = vmatprep.subr.bf16.mxu0 0
    %176 = vmatpush1.bf16.msra.mxu0 0
    %177 = vmatprep.subr.bf16.mxu0 0
    %178 = vmatpush1.bf16.msra.mxu0 0
    %179 = vmatprep.subr.bf16.mxu0 0
    %180 = vmatpush1.bf16.msra.mxu0 0
    %181 = vmatprep.subr.bf16.mxu0 0
    %182 = vmatpush1.bf16.msra.mxu0 0
    %183 = vmatprep.subr.bf16.mxu0 0
    %184 = vmatpush1.bf16.msra.mxu0 %v166
    %185 = vmatprep.subr.bf16.mxu0 0
    %186 = vmatpush1.bf16.msra.mxu0 %v165
    %187 = vmatprep.subr.bf16.mxu0 0
    %188 = vmatpush1.bf16.msra.mxu0 %v164
    %189 = vmatprep.subr.bf16.mxu0 0
    %190 = vmatpush1.bf16.msra.mxu0 %v163
    %191 = vmatprep.subr.bf16.mxu0 0
    %192 = vmatpush2.bf16.msra.mxu0 0
    %193 = vmatprep.subr.bf16.mxu0 0
    %194 = vmatpush2.bf16.msra.mxu0 0
    %195 = vmatprep.subr.bf16.mxu0 0
    %196 = vmatpush2.bf16.msra.mxu0 0
    %197 = vmatprep.subr.bf16.mxu0 0
    %198 = vmatpush2.bf16.msra.mxu0 0
    %199 = vmatprep.subr.bf16.mxu0 0
    %200 = vmatpush2.bf16.msra.mxu0 0
    %201 = vmatprep.subr.bf16.mxu0 0
    %202 = vmatpush2.bf16.msra.mxu0 0
    %203 = vmatprep.subr.bf16.mxu0 0
    %204 = vmatpush2.bf16.msra.mxu0 0
    %205 = vmatprep.subr.bf16.mxu0 0
    %206 = vmatpush2.bf16.msra.mxu0 0
    %207 = vmatprep.mubr.bf16.mxu0 0
    %208 = vmatmul.mubr.bf16.gmra.mxu0 %v173
    %v209 = vpop.f32.mrf.mxu0
    %v210 = vadd.f32 %v145, %v209
    %v211 = vpop.f32.mrf.mxu0
    %v212 = vpop.f32.mrf.mxu0
    %v213 = vadd.f32 %v145, %v212
    %v214 = vpop.f32.mrf.mxu0
    %215 = vdwg.mxu0
    %vm216 = vcmp.gt.f32.partialorder %v210, 0.0
    %vm217 = vcmp.gt.f32.partialorder %v213, 0.0
    %v218 = vmin.f32 %v210, 0.0
    %v219 = vmin.f32 %v213, 0.0
    %v220 = vmul.f32 %v218, 1.442695
    %v221 = vpow.pop %v220
    %v222 = vmul.f32 %v219, 1.442695
    %v223 = vpow.pop %v222
    %v224 = vsub.f32 %v221, 1.0
    %v225 = vsub.f32 %v223, 1.0
    %v226 = vsel %vm216, %v210, %v224
    %v227 = vsel %vm217, %v213, %v225
    %v228 = vpack.c.bf16 %v227, %v226
    %v229 = vld [vmem:[#allocation4] sm:$0xf]
    %v230 = vld [vmem:[#allocation4 + $0x4] sm:$0xf]
    %v231 = vld [vmem:[#allocation4 + $0x8] sm:$0xf]
    %v232 = vld [vmem:[#allocation4 + $0xc] sm:$0xf]
    %v233 = vld [vmem:[#allocation4 + $0x10] sm:$0xf]
    %v234 = vld [vmem:[#allocation4 + $0x14] sm:$0xf]
    %v235 = vld [vmem:[#allocation4 + $0x18] sm:$0xf]
    %v236 = vld [vmem:[#allocation4 + $0x1c] sm:$0xf]
    %v237 = vld [vmem:[#allocation4 + $0x20] sm:$0xf]
    %v238 = vld [vmem:[#allocation4 + $0x24] sm:$0xf]
    %v239 = vld [vmem:[#allocation4 + $0x28] sm:$0xf]
    %v240 = vld [vmem:[#allocation4 + $0x2c] sm:$0xf]
    %v241 = vld [vmem:[#allocation4 + $0x30] sm:$0xf]
    %v242 = vld [vmem:[#allocation4 + $0x34] sm:$0xf]
    %v243 = vld [vmem:[#allocation4 + $0x38] sm:$0xf]
    %v244 = vld [vmem:[#allocation4 + $0x3c] sm:$0xf]
    %v245 = vld [vmem:[%s4] sm:$0x1]
    %v247 = vlaneseq
    %v248 = vshrl.u32 %v247, 7
    %v249 = vsub.s32 0, %v248
    %v250 = vrot.slane %v245, %v249
    %v268 = vunpack.c.l.b16 %v229
    %v269 = vunpack.c.l.b16 %v230
    %v270 = vunpack.c.l.b16 %v231
    %v271 = vunpack.c.l.b16 %v232
    %v272 = vunpack.c.l.b16 %v233
    %v273 = vunpack.c.l.b16 %v234
    %v274 = vunpack.c.l.b16 %v235
    %v275 = vunpack.c.l.b16 %v236
    %v276 = vunpack.c.l.b16 %v237
    %v277 = vunpack.c.l.b16 %v238
    %v278 = vunpack.c.l.b16 %v239
    %v279 = vunpack.c.l.b16 %v240
    %v280 = vunpack.c.l.b16 %v241
    %v281 = vunpack.c.l.b16 %v242
    %v282 = vunpack.c.l.b16 %v243
    %v283 = vunpack.c.l.b16 %v244
    %v284 = vpack.c.b16 %v269, %v268
    %v285 = vpack.c.b16 %v271, %v270
    %v286 = vpack.c.b16 %v273, %v272
    %v287 = vpack.c.b16 %v275, %v274
    %v288 = vpack.c.b16 %v277, %v276
    %v289 = vpack.c.b16 %v279, %v278
    %v290 = vpack.c.b16 %v281, %v280
    %v291 = vpack.c.b16 %v283, %v282
    %300 = vmatprep.subr.bf16.mxu0 0
    %301 = vmatpush1.bf16.msra.mxu0 %v291
    %302 = vmatprep.subr.bf16.mxu0 0
    %303 = vmatpush1.bf16.msra.mxu0 %v290
    %304 = vmatprep.subr.bf16.mxu0 0
    %305 = vmatpush1.bf16.msra.mxu0 %v289
    %306 = vmatprep.subr.bf16.mxu0 0
    %307 = vmatpush1.bf16.msra.mxu0 %v288
    %308 = vmatprep.subr.bf16.mxu0 0
    %309 = vmatpush1.bf16.msra.mxu0 %v287
    %310 = vmatprep.subr.bf16.mxu0 0
    %311 = vmatpush1.bf16.msra.mxu0 %v286
    %312 = vmatprep.subr.bf16.mxu0 0
    %313 = vmatpush1.bf16.msra.mxu0 %v285
    %314 = vmatprep.subr.bf16.mxu0 0
    %315 = vmatpush1.bf16.msra.mxu0 %v284
    %316 = vmatprep.subr.bf16.mxu0 0
    %317 = vmatpush2.bf16.msra.mxu0 0
    %318 = vmatprep.subr.bf16.mxu0 0
    %319 = vmatpush2.bf16.msra.mxu0 0
    %320 = vmatprep.subr.bf16.mxu0 0
    %321 = vmatpush2.bf16.msra.mxu0 0
    %322 = vmatprep.subr.bf16.mxu0 0
    %323 = vmatpush2.bf16.msra.mxu0 0
    %324 = vmatprep.subr.bf16.mxu0 0
    %325 = vmatpush2.bf16.msra.mxu0 0
    %326 = vmatprep.subr.bf16.mxu0 0
    %327 = vmatpush2.bf16.msra.mxu0 0
    %328 = vmatprep.subr.bf16.mxu0 0
    %329 = vmatpush2.bf16.msra.mxu0 0
    %330 = vmatprep.subr.bf16.mxu0 0
    %331 = vmatpush2.bf16.msra.mxu0 0
    %332 = vmatprep.mubr.bf16.mxu0 0
    %333 = vmatmul.mubr.bf16.gmra.mxu0 %v228
    %v334 = vpop.f32.mrf.mxu0
    %v335 = vadd.f32 %v250, %v334
    %v336 = vpop.f32.mrf.mxu0
    %v337 = vpop.f32.mrf.mxu0
    %v338 = vadd.f32 %v250, %v337
    %v339 = vpop.f32.mrf.mxu0
    %340 = vdwg.mxu0
    %v341 = vpack.c.bf16 %v338, %v335
    %v342 = vld [vmem:[#allocation6] sm:$0xf]
    %v343 = vld [vmem:[#allocation6 + $0x4] sm:$0xf]
    %v344 = vld [vmem:[#allocation6 + $0x8] sm:$0xf]
    %v345 = vld [vmem:[#allocation6 + $0xc] sm:$0xf]
    %v346 = vld [vmem:[#allocation6 + $0x10] sm:$0xf]
    %v347 = vld [vmem:[#allocation6 + $0x14] sm:$0xf]
    %v348 = vld [vmem:[#allocation6 + $0x18] sm:$0xf]
    %v349 = vld [vmem:[#allocation6 + $0x1c] sm:$0xf]
    %v350 = vld [vmem:[#allocation6 + $0x20] sm:$0xf]
    %v351 = vld [vmem:[#allocation6 + $0x24] sm:$0xf]
    %v352 = vld [vmem:[#allocation6 + $0x28] sm:$0xf]
    %v353 = vld [vmem:[#allocation6 + $0x2c] sm:$0xf]
    %v354 = vld [vmem:[#allocation6 + $0x30] sm:$0xf]
    %v355 = vld [vmem:[#allocation6 + $0x34] sm:$0xf]
    %v356 = vld [vmem:[#allocation6 + $0x38] sm:$0xf]
    %v357 = vld [vmem:[#allocation6 + $0x3c] sm:$0xf]
    %v358 = vld [vmem:[%s6] sm:$0x1]
    %v360 = vlaneseq
    %v361 = vshrl.u32 %v360, 7
    %v362 = vsub.s32 0, %v361
    %v363 = vrot.slane %v358, %v362
    %v381 = vunpack.c.l.b16 %v342
    %v382 = vunpack.c.l.b16 %v343
    %v383 = vunpack.c.l.b16 %v344
    %v384 = vunpack.c.l.b16 %v345
    %v385 = vunpack.c.l.b16 %v346
    %v386 = vunpack.c.l.b16 %v347
    %v387 = vunpack.c.l.b16 %v348
    %v388 = vunpack.c.l.b16 %v349
    %v389 = vunpack.c.l.b16 %v350
    %v390 = vunpack.c.l.b16 %v351
    %v391 = vunpack.c.l.b16 %v352
    %v392 = vunpack.c.l.b16 %v353
    %v393 = vunpack.c.l.b16 %v354
    %v394 = vunpack.c.l.b16 %v355
    %v395 = vunpack.c.l.b16 %v356
    %v396 = vunpack.c.l.b16 %v357
    %v397 = vpack.c.b16 %v382, %v381
    %v398 = vpack.c.b16 %v384, %v383
    %v399 = vpack.c.b16 %v386, %v385
    %v400 = vpack.c.b16 %v388, %v387
    %v401 = vpack.c.b16 %v390, %v389
    %v402 = vpack.c.b16 %v392, %v391
    %v403 = vpack.c.b16 %v394, %v393
    %v404 = vpack.c.b16 %v396, %v395
    %413 = vmatprep.subr.bf16.mxu0 0
    %414 = vmatpush1.bf16.msra.mxu0 %v404
    %415 = vmatprep.subr.bf16.mxu0 0
    %416 = vmatpush1.bf16.msra.mxu0 %v403
    %417 = vmatprep.subr.bf16.mxu0 0
    %418 = vmatpush1.bf16.msra.mxu0 %v402
    %419 = vmatprep.subr.bf16.mxu0 0
    %420 = vmatpush1.bf16.msra.mxu0 %v401
    %421 = vmatprep.subr.bf16.mxu0 0
    %422 = vmatpush1.bf16.msra.mxu0 %v400
    %423 = vmatprep.subr.bf16.mxu0 0
    %424 = vmatpush1.bf16.msra.mxu0 %v399
    %425 = vmatprep.subr.bf16.mxu0 0
    %426 = vmatpush1.bf16.msra.mxu0 %v398
    %427 = vmatprep.subr.bf16.mxu0 0
    %428 = vmatpush1.bf16.msra.mxu0 %v397
    %429 = vmatprep.subr.bf16.mxu0 0
    %430 = vmatpush2.bf16.msra.mxu0 0
    %431 = vmatprep.subr.bf16.mxu0 0
    %432 = vmatpush2.bf16.msra.mxu0 0
    %433 = vmatprep.subr.bf16.mxu0 0
    %434 = vmatpush2.bf16.msra.mxu0 0
    %435 = vmatprep.subr.bf16.mxu0 0
    %436 = vmatpush2.bf16.msra.mxu0 0
    %437 = vmatprep.subr.bf16.mxu0 0
    %438 = vmatpush2.bf16.msra.mxu0 0
    %439 = vmatprep.subr.bf16.mxu0 0
    %440 = vmatpush2.bf16.msra.mxu0 0
    %441 = vmatprep.subr.bf16.mxu0 0
    %442 = vmatpush2.bf16.msra.mxu0 0
    %443 = vmatprep.subr.bf16.mxu0 0
    %444 = vmatpush2.bf16.msra.mxu0 0
    %445 = vmatprep.mubr.bf16.mxu0 0
    %446 = vmatmul.mubr.bf16.gmra.mxu0 %v341
    %v447 = vpop.f32.mrf.mxu0
    %v448 = vadd.f32 %v363, %v447
    %v449 = vpop.f32.mrf.mxu0
    %v450 = vpop.f32.mrf.mxu0
    %v451 = vadd.f32 %v363, %v450
    %v452 = vpop.f32.mrf.mxu0
    %453 = vdwg.mxu0
    %454 = vst [vmem:[%s14] sm:$0xff] %v448
    %455 = vst [vmem:[%s14 + $0x8] sm:$0xff] %v451
    %v456 = vpack.c.bf16 %v451, %v448
    %v457 = vld [vmem:[#allocation7] sm:$0xf]
    %v458 = vld [vmem:[#allocation7 + $0x4] sm:$0xf]
    %v459 = vld [vmem:[#allocation7 + $0x8] sm:$0xf]
    %v460 = vld [vmem:[#allocation7 + $0xc] sm:$0xf]
    %v461 = vld [vmem:[#allocation7 + $0x10] sm:$0xf]
    %v462 = vld [vmem:[#allocation7 + $0x14] sm:$0xf]
    %v463 = vld [vmem:[#allocation7 + $0x18] sm:$0xf]
    %v464 = vld [vmem:[#allocation7 + $0x1c] sm:$0xf]
    %v465 = vld [vmem:[#allocation7 + $0x20] sm:$0xf]
    %v466 = vld [vmem:[#allocation7 + $0x24] sm:$0xf]
    %v467 = vld [vmem:[#allocation7 + $0x28] sm:$0xf]
    %v468 = vld [vmem:[#allocation7 + $0x2c] sm:$0xf]
    %v469 = vld [vmem:[#allocation7 + $0x30] sm:$0xf]
    %v470 = vld [vmem:[#allocation7 + $0x34] sm:$0xf]
    %v471 = vld [vmem:[#allocation7 + $0x38] sm:$0xf]
    %v472 = vld [vmem:[#allocation7 + $0x3c] sm:$0xf]
    %v473 = vld [vmem:[%s8] sm:$0x1]
    %v475 = vlaneseq
    %v476 = vshrl.u32 %v475, 7
    %v477 = vsub.s32 0, %v476
    %v478 = vrot.slane %v473, %v477
    %v496 = vunpack.c.l.b16 %v457
    %v497 = vunpack.c.l.b16 %v458
    %v498 = vunpack.c.l.b16 %v459
    %v499 = vunpack.c.l.b16 %v460
    %v500 = vunpack.c.l.b16 %v461
    %v501 = vunpack.c.l.b16 %v462
    %v502 = vunpack.c.l.b16 %v463
    %v503 = vunpack.c.l.b16 %v464
    %v504 = vunpack.c.l.b16 %v465
    %v505 = vunpack.c.l.b16 %v466
    %v506 = vunpack.c.l.b16 %v467
    %v507 = vunpack.c.l.b16 %v468
    %v508 = vunpack.c.l.b16 %v469
    %v509 = vunpack.c.l.b16 %v470
    %v510 = vunpack.c.l.b16 %v471
    %v511 = vunpack.c.l.b16 %v472
    %v512 = vpack.c.b16 %v497, %v496
    %v513 = vpack.c.b16 %v499, %v498
    %v514 = vpack.c.b16 %v501, %v500
    %v515 = vpack.c.b16 %v503, %v502
    %v516 = vpack.c.b16 %v505, %v504
    %v517 = vpack.c.b16 %v507, %v506
    %v518 = vpack.c.b16 %v509, %v508
    %v519 = vpack.c.b16 %v511, %v510
    %528 = vmatprep.subr.bf16.mxu0 0
    %529 = vmatpush1.bf16.msra.mxu0 %v519
    %530 = vmatprep.subr.bf16.mxu0 0
    %531 = vmatpush1.bf16.msra.mxu0 %v518
    %532 = vmatprep.subr.bf16.mxu0 0
    %533 = vmatpush1.bf16.msra.mxu0 %v517
    %534 = vmatprep.subr.bf16.mxu0 0
    %535 = vmatpush1.bf16.msra.mxu0 %v516
    %536 = vmatprep.subr.bf16.mxu0 0
    %537 = vmatpush1.bf16.msra.mxu0 %v515
    %538 = vmatprep.subr.bf16.mxu0 0
    %539 = vmatpush1.bf16.msra.mxu0 %v514
    %540 = vmatprep.subr.bf16.mxu0 0
    %541 = vmatpush1.bf16.msra.mxu0 %v513
    %542 = vmatprep.subr.bf16.mxu0 0
    %543 = vmatpush1.bf16.msra.mxu0 %v512
    %544 = vmatprep.subr.bf16.mxu0 0
    %545 = vmatpush2.bf16.msra.mxu0 0
    %546 = vmatprep.subr.bf16.mxu0 0
    %547 = vmatpush2.bf16.msra.mxu0 0
    %548 = vmatprep.subr.bf16.mxu0 0
    %549 = vmatpush2.bf16.msra.mxu0 0
    %550 = vmatprep.subr.bf16.mxu0 0
    %551 = vmatpush2.bf16.msra.mxu0 0
    %552 = vmatprep.subr.bf16.mxu0 0
    %553 = vmatpush2.bf16.msra.mxu0 0
    %554 = vmatprep.subr.bf16.mxu0 0
    %555 = vmatpush2.bf16.msra.mxu0 0
    %556 = vmatprep.subr.bf16.mxu0 0
    %557 = vmatpush2.bf16.msra.mxu0 0
    %558 = vmatprep.subr.bf16.mxu0 0
    %559 = vmatpush2.bf16.msra.mxu0 0
    %560 = vmatprep.mubr.bf16.mxu0 0
    %561 = vmatmul.mubr.bf16.gmra.mxu0 %v456
    %v562 = vpop.f32.mrf.mxu0
    %v563 = vadd.f32 %v478, %v562
    %v564 = vpop.f32.mrf.mxu0
    %v565 = vpop.f32.mrf.mxu0
    %v566 = vadd.f32 %v478, %v565
    %v567 = vpop.f32.mrf.mxu0
    %568 = vdwg.mxu0
    %vm569 = vcmp.gt.f32.partialorder %v563, 0.0
    %vm570 = vcmp.gt.f32.partialorder %v566, 0.0
    %v571 = vmin.f32 %v563, 0.0
    %v572 = vmin.f32 %v566, 0.0
    %v573 = vmul.f32 %v571, 1.442695
    %v574 = vpow.pop %v573
    %v575 = vmul.f32 %v572, 1.442695
    %v576 = vpow.pop %v575
    %v577 = vsub.f32 %v574, 1.0
    %v578 = vsub.f32 %v576, 1.0
    %v579 = vsel %vm569, %v563, %v577
    %v580 = vsel %vm570, %v566, %v578
    %v581 = vpack.c.bf16 %v580, %v579
    %v582 = vld [vmem:[#allocation9] sm:$0xf]
    %v583 = vld [vmem:[#allocation9 + $0x4] sm:$0xf]
    %v584 = vld [vmem:[#allocation9 + $0x8] sm:$0xf]
    %v585 = vld [vmem:[#allocation9 + $0xc] sm:$0xf]
    %v586 = vld [vmem:[#allocation9 + $0x10] sm:$0xf]
    %v587 = vld [vmem:[#allocation9 + $0x14] sm:$0xf]
    %v588 = vld [vmem:[#allocation9 + $0x18] sm:$0xf]
    %v589 = vld [vmem:[#allocation9 + $0x1c] sm:$0xf]
    %v590 = vld [vmem:[#allocation9 + $0x20] sm:$0xf]
    %v591 = vld [vmem:[#allocation9 + $0x24] sm:$0xf]
    %v592 = vld [vmem:[#allocation9 + $0x28] sm:$0xf]
    %v593 = vld [vmem:[#allocation9 + $0x2c] sm:$0xf]
    %v594 = vld [vmem:[#allocation9 + $0x30] sm:$0xf]
    %v595 = vld [vmem:[#allocation9 + $0x34] sm:$0xf]
    %v596 = vld [vmem:[#allocation9 + $0x38] sm:$0xf]
    %v597 = vld [vmem:[#allocation9 + $0x3c] sm:$0xf]
    %v598 = vld [vmem:[%s10] sm:$0x1]
    %v600 = vlaneseq
    %v601 = vshrl.u32 %v600, 7
    %v602 = vsub.s32 0, %v601
    %v603 = vrot.slane %v598, %v602
    %v621 = vunpack.c.l.b16 %v582
    %v622 = vunpack.c.l.b16 %v583
    %v623 = vunpack.c.l.b16 %v584
    %v624 = vunpack.c.l.b16 %v585
    %v625 = vunpack.c.l.b16 %v586
    %v626 = vunpack.c.l.b16 %v587
    %v627 = vunpack.c.l.b16 %v588
    %v628 = vunpack.c.l.b16 %v589
    %v629 = vunpack.c.l.b16 %v590
    %v630 = vunpack.c.l.b16 %v591
    %v631 = vunpack.c.l.b16 %v592
    %v632 = vunpack.c.l.b16 %v593
    %v633 = vunpack.c.l.b16 %v594
    %v634 = vunpack.c.l.b16 %v595
    %v635 = vunpack.c.l.b16 %v596
    %v636 = vunpack.c.l.b16 %v597
    %v637 = vpack.c.b16 %v622, %v621
    %v638 = vpack.c.b16 %v624, %v623
    %v639 = vpack.c.b16 %v626, %v625
    %v640 = vpack.c.b16 %v628, %v627
    %v641 = vpack.c.b16 %v630, %v629
    %v642 = vpack.c.b16 %v632, %v631
    %v643 = vpack.c.b16 %v634, %v633
    %v644 = vpack.c.b16 %v636, %v635
    %653 = vmatprep.subr.bf16.mxu0 0
    %654 = vmatpush1.bf16.msra.mxu0 %v644
    %655 = vmatprep.subr.bf16.mxu0 0
    %656 = vmatpush1.bf16.msra.mxu0 %v643
    %657 = vmatprep.subr.bf16.mxu0 0
    %658 = vmatpush1.bf16.msra.mxu0 %v642
    %659 = vmatprep.subr.bf16.mxu0 0
    %660 = vmatpush1.bf16.msra.mxu0 %v641
    %661 = vmatprep.subr.bf16.mxu0 0
    %662 = vmatpush1.bf16.msra.mxu0 %v640
    %663 = vmatprep.subr.bf16.mxu0 0
    %664 = vmatpush1.bf16.msra.mxu0 %v639
    %665 = vmatprep.subr.bf16.mxu0 0
    %666 = vmatpush1.bf16.msra.mxu0 %v638
    %667 = vmatprep.subr.bf16.mxu0 0
    %668 = vmatpush1.bf16.msra.mxu0 %v637
    %669 = vmatprep.subr.bf16.mxu0 0
    %670 = vmatpush2.bf16.msra.mxu0 0
    %671 = vmatprep.subr.bf16.mxu0 0
    %672 = vmatpush2.bf16.msra.mxu0 0
    %673 = vmatprep.subr.bf16.mxu0 0
    %674 = vmatpush2.bf16.msra.mxu0 0
    %675 = vmatprep.subr.bf16.mxu0 0
    %676 = vmatpush2.bf16.msra.mxu0 0
    %677 = vmatprep.subr.bf16.mxu0 0
    %678 = vmatpush2.bf16.msra.mxu0 0
    %679 = vmatprep.subr.bf16.mxu0 0
    %680 = vmatpush2.bf16.msra.mxu0 0
    %681 = vmatprep.subr.bf16.mxu0 0
    %682 = vmatpush2.bf16.msra.mxu0 0
    %683 = vmatprep.subr.bf16.mxu0 0
    %684 = vmatpush2.bf16.msra.mxu0 0
    %685 = vmatprep.mubr.bf16.mxu0 0
    %686 = vmatmul.mubr.bf16.gmra.mxu0 %v581
    %v687 = vpop.f32.mrf.mxu0
    %v688 = vadd.f32 %v603, %v687
    %v689 = vpop.f32.mrf.mxu0
    %v690 = vpop.f32.mrf.mxu0
    %v691 = vadd.f32 %v603, %v690
    %v692 = vpop.f32.mrf.mxu0
    %693 = vdwg.mxu0
    %vm694 = vcmp.gt.f32.partialorder %v688, 0.0
    %vm695 = vcmp.gt.f32.partialorder %v691, 0.0
    %v696 = vmin.f32 %v688, 0.0
    %v697 = vmin.f32 %v691, 0.0
    %v698 = vmul.f32 %v696, 1.442695
    %v699 = vpow.pop %v698
    %v700 = vmul.f32 %v697, 1.442695
    %v701 = vpow.pop %v700
    %v702 = vsub.f32 %v699, 1.0
    %v703 = vsub.f32 %v701, 1.0
    %v704 = vsel %vm694, %v688, %v702
    %v705 = vsel %vm695, %v691, %v703
    %v706 = vpack.c.bf16 %v705, %v704
    %v707 = vld [vmem:[#allocation10] sm:$0xf]
    %v708 = vld [vmem:[#allocation10 + $0x4] sm:$0xf]
    %v709 = vld [vmem:[#allocation10 + $0x8] sm:$0xf]
    %v710 = vld [vmem:[#allocation10 + $0xc] sm:$0xf]
    %v711 = vld [vmem:[#allocation10 + $0x10] sm:$0xf]
    %v712 = vld [vmem:[#allocation10 + $0x14] sm:$0xf]
    %v713 = vld [vmem:[#allocation10 + $0x18] sm:$0xf]
    %v714 = vld [vmem:[#allocation10 + $0x1c] sm:$0xf]
    %v715 = vld [vmem:[#allocation10 + $0x20] sm:$0xf]
    %v716 = vld [vmem:[#allocation10 + $0x24] sm:$0xf]
    %v717 = vld [vmem:[#allocation10 + $0x28] sm:$0xf]
    %v718 = vld [vmem:[#allocation10 + $0x2c] sm:$0xf]
    %v719 = vld [vmem:[#allocation10 + $0x30] sm:$0xf]
    %v720 = vld [vmem:[#allocation10 + $0x34] sm:$0xf]
    %v721 = vld [vmem:[#allocation10 + $0x38] sm:$0xf]
    %v722 = vld [vmem:[#allocation10 + $0x3c] sm:$0xf]
    %v723 = vld [vmem:[%s12] sm:$0x1]
    %v725 = vlaneseq
    %v726 = vshrl.u32 %v725, 7
    %v727 = vsub.s32 0, %v726
    %v728 = vrot.slane %v723, %v727
    %v746 = vunpack.c.l.b16 %v707
    %v747 = vunpack.c.l.b16 %v708
    %v748 = vunpack.c.l.b16 %v709
    %v749 = vunpack.c.l.b16 %v710
    %v750 = vunpack.c.l.b16 %v711
    %v751 = vunpack.c.l.b16 %v712
    %v752 = vunpack.c.l.b16 %v713
    %v753 = vunpack.c.l.b16 %v714
    %v754 = vunpack.c.l.b16 %v715
    %v755 = vunpack.c.l.b16 %v716
    %v756 = vunpack.c.l.b16 %v717
    %v757 = vunpack.c.l.b16 %v718
    %v758 = vunpack.c.l.b16 %v719
    %v759 = vunpack.c.l.b16 %v720
    %v760 = vunpack.c.l.b16 %v721
    %v761 = vunpack.c.l.b16 %v722
    %v762 = vpack.c.b16 %v747, %v746
    %v763 = vpack.c.b16 %v749, %v748
    %v764 = vpack.c.b16 %v751, %v750
    %v765 = vpack.c.b16 %v753, %v752
    %v766 = vpack.c.b16 %v755, %v754
    %v767 = vpack.c.b16 %v757, %v756
    %v768 = vpack.c.b16 %v759, %v758
    %v769 = vpack.c.b16 %v761, %v760
    %778 = vmatprep.subr.bf16.mxu0 0
    %779 = vmatpush1.bf16.msra.mxu0 %v769
    %780 = vmatprep.subr.bf16.mxu0 0
    %781 = vmatpush1.bf16.msra.mxu0 %v768
    %782 = vmatprep.subr.bf16.mxu0 0
    %783 = vmatpush1.bf16.msra.mxu0 %v767
    %784 = vmatprep.subr.bf16.mxu0 0
    %785 = vmatpush1.bf16.msra.mxu0 %v766
    %786 = vmatprep.subr.bf16.mxu0 0
    %787 = vmatpush1.bf16.msra.mxu0 %v765
    %788 = vmatprep.subr.bf16.mxu0 0
    %789 = vmatpush1.bf16.msra.mxu0 %v764
    %790 = vmatprep.subr.bf16.mxu0 0
    %791 = vmatpush1.bf16.msra.mxu0 %v763
    %792 = vmatprep.subr.bf16.mxu0 0
    %793 = vmatpush1.bf16.msra.mxu0 %v762
    %794 = vmatprep.subr.bf16.mxu0 0
    %795 = vmatpush2.bf16.msra.mxu0 0
    %796 = vmatprep.subr.bf16.mxu0 0
    %797 = vmatpush2.bf16.msra.mxu0 0
    %798 = vmatprep.subr.bf16.mxu0 0
    %799 = vmatpush2.bf16.msra.mxu0 0
    %800 = vmatprep.subr.bf16.mxu0 0
    %801 = vmatpush2.bf16.msra.mxu0 0
    %802 = vmatprep.subr.bf16.mxu0 0
    %803 = vmatpush2.bf16.msra.mxu0 0
    %804 = vmatprep.subr.bf16.mxu0 0
    %805 = vmatpush2.bf16.msra.mxu0 0
    %806 = vmatprep.subr.bf16.mxu0 0
    %807 = vmatpush2.bf16.msra.mxu0 0
    %808 = vmatprep.subr.bf16.mxu0 0
    %809 = vmatpush2.bf16.msra.mxu0 0
    %810 = vmatprep.mubr.bf16.mxu0 0
    %811 = vmatmul.mubr.bf16.gmra.mxu0 %v706
    %v812 = vpop.f32.mrf.mxu0
    %v813 = vadd.f32 %v728, %v812
    %v814 = vpop.f32.mrf.mxu0
    %v815 = vpop.f32.mrf.mxu0
    %v816 = vadd.f32 %v728, %v815
    %v817 = vpop.f32.mrf.mxu0
    %818 = vdwg.mxu0
    %v819 = vsub.f32 0.0, %v813
    %v820 = vsub.f32 0.0, %v816
    %v821 = vmul.f32 %v819, 1.442695
    %v822 = vpow.pop %v821
    %v823 = vmul.f32 %v820, 1.442695
    %v824 = vpow.pop %v823
    %v825 = vadd.f32 %v822, 1.0
    %v826 = vadd.f32 %v824, 1.0
    %v827 = vrcp.pop %v825
    %v828 = vmul.f32 1.0, %v827
    %v829 = vrcp.pop %v826
    %v830 = vmul.f32 1.0, %v829
    %831 = vst [vmem:[%s13] sm:$0xff] %v828
    %832 = vst [vmem:[%s13 + $0x8] sm:$0xff] %v830
    // Predicated region
    $region78: #{dense_autoencoder_forward.1} parent=1 // pred_check
      _
    $region79: #{dense_autoencoder_forward.1} parent=1 // pred_check_branch
      %834 = sbr.rel (0) target = $region81
    $region80: #{dense_autoencoder_forward.1} parent=1 // pred_region
      _
    $region81: #{dense_autoencoder_forward.1} parent=1 // pred_fallthru
      _
    // Predicated region
    $region82: #{dense_autoencoder_forward.1} parent=1 // pred_check
      _
    $region83: #{dense_autoencoder_forward.1} parent=1 // pred_check_branch
      %836 = sbr.rel (0) target = $region85
    $region84: #{dense_autoencoder_forward.1} parent=1 // pred_region
      _
    $region85: #{dense_autoencoder_forward.1} parent=1 // pred_fallthru
      _
    // Predicated region
    $region86: #{dense_autoencoder_forward.1} parent=1 // pred_check
      _
    $region87: #{dense_autoencoder_forward.1} parent=1 // pred_check_branch
      %838 = sbr.rel (0) target = $region89
    $region88: #{dense_autoencoder_forward.1} parent=1 // pred_region
      _
    $region89: #{dense_autoencoder_forward.1} parent=1 // pred_fallthru
      _
    // Predicated region
    $region90: #{dense_autoencoder_forward.1} parent=1 // pred_check
      _
    $region91: #{dense_autoencoder_forward.1} parent=1 // pred_check_branch
      %840 = sbr.rel (0) target = $region93
    $region92: #{dense_autoencoder_forward.1} parent=1 // pred_region
      _
    $region93: #{dense_autoencoder_forward.1} parent=1 // pred_fallthru
      _
    %841 = vsyncpa [#allocation3], 1
    %842 = vsyncpa [#allocation5], 1
    %843 = vsyncpa [#allocation8], 1
    %844 = vsyncpa [#allocation11], 1

</llo_original>
